<compile_context>
chip_gen: v7x
topology: tpu7x:2x2x1
jax: 0.10.0
libtpu: 0.0.40
codegen_flags: <defaults>
</compile_context>

<pallas_src>
import functools

import jax
import jax.numpy as jnp
from jax import lax
from jax.experimental import pallas as pl
from jax.experimental.pallas import tpu as pltpu

_LANE = 128


def _round_up(v, n):
    return (v + n - 1) // n * n


def _round_down(v, n):
    return v // n * n


def _pad2d(a, rows, cols):
    pr, pc = rows - a.shape[0], cols - a.shape[1]
    if pr == 0 and pc == 0:
        return a
    return jnp.pad(a, ((0, pr), (0, pc)))


def _vmem_capacity_bytes():
    """Physical VMEM of the attached TPU; conservative (v7x) fallback."""
    try:
        info = pltpu.get_tpu_info()
        cap = int(getattr(info, "vmem_capacity_bytes", 0) or 0)
        if cap > 0:
            return cap
    except Exception:
        pass
    return 64 * 1024 * 1024


def _working_set_bytes(tm, tn, tk, in_bytes, out_bytes, residual):
    ws = 2 * tm * tk * in_bytes          # x tiles     (double-buffered)
    ws += 2 * tk * tn * in_bytes         # W^T tiles   (double-buffered)
    ws += 2 * tn * 4                     # bias tile
    ws += 2 * tm * tn * out_bytes        # output tiles (double-buffered)
    ws += tm * tn * 4                    # f32 accumulator scratch
    if residual:
        ws += 2 * tm * tn * in_bytes     # residual tiles
    return ws


def _resnet_kernel(*refs, tau, m, residual_net):
    if residual_net:
        x_ref, w_ref, b_ref, res_ref, o_ref, acc_ref = refs
    else:
        x_ref, w_ref, b_ref, o_ref, acc_ref = refs
        res_ref = None

    k = pl.program_id(2)

    @pl.when(k == 0)
    def _():
        acc_ref[...] = jnp.zeros_like(acc_ref)

    # x tile (tm, tk) @ W^T tile (tk, tn): canonical MXU contraction; W was
    # transposed ONCE at parameter-prep time, so no per-step transpose here.
    acc_ref[...] += jnp.dot(x_ref[...], w_ref[...],
                            preferred_element_type=jnp.float32)

    @pl.when(k == pl.num_programs(2) - 1)
    def _():
        y = acc_ref[...] + b_ref[...]                    # (tm, tn) + (1, tn)
        # ClipReLU as clamp: 3 VPU ops. (NaN mapping differs from the PyTorch
        # boolean-mask formulation only if inputs contain NaN.)
        y = jnp.minimum(jnp.maximum(y - tau, 0.0), m)
        if residual_net:
            y = y + res_ref[...].astype(jnp.float32)
        o_ref[...] = y.astype(o_ref.dtype)


class PallasResNet:
    """Pallas-TPU forward for the PyTorch ResNet (Linear + ClipReLU [+ residual]).

    Heavy parameter prep (transpose + pad + cast) runs once in __init__ and is
    amortised over every forward call.
    """

    def __init__(self, weight, bias, *, tau, m, residual_net=False,
                 compute_dtype=jnp.bfloat16, weight_buffers=None):
        OUT, IN = weight.shape
        if bias.shape != (OUT,):
            raise ValueError("bias shape mismatch")
        if residual_net and IN != OUT:
            raise ValueError("residual_net=True requires input_size == output_size")

        self.IN, self.OUT = IN, OUT
        self.tau, self.m = float(tau), float(m)
        self.residual_net = bool(residual_net)
        self.compute_dtype = jnp.dtype(compute_dtype)
        self.weight_buffers = weight_buffers          # opt-in pl.Buffered(n) on W

        in_bytes = self.compute_dtype.itemsize
        self.sublane = 16 if in_bytes < 4 else 8      # bf16 sublane packing

        np_full = _round_up(OUT, _LANE)
        kp_full = _round_up(IN, _LANE)

        cap = _vmem_capacity_bytes()
        budget = int(0.55 * cap)

        tn = min(np_full, 1024)
        tk = min(kp_full, 1024)

        # v7x has 2 TensorCores: guarantee >=2 blocks on a "parallel" axis even
        # when the whole batch fits one M tile (harmless on 1-TC v5e/v6e).
        if tn >= np_full and np_full >= 2 * _LANE:
            half = np_full // 2
            tn = max(_LANE, _round_down(half, 256) or _round_down(half, _LANE))

        if self.residual_net:
            # Force tn == tk so Kp == Np and the padded activation is reused as
            # the residual stream (no second HBM materialisation of x).
            tk = tn = min(tn, tk)

        # Shrink (rarely triggered) until the double-buffered set fits VMEM.
        tm_cap = 512
        while _working_set_bytes(tm_cap, tn, tk, in_bytes, 4,
                                 self.residual_net) > budget:
            if self.residual_net:
                if tn > _LANE:
                    tn = tk = max(_LANE, _round_down(tn // 2, _LANE))
                elif tm_cap > self.sublane:
                    tm_cap = max(self.sublane, tm_cap // 2)
                else:
                    break
            else:
                if tk >= tn and tk > _LANE:
                    tk = max(_LANE, _round_down(tk // 2, _LANE))
                elif tn > _LANE:
                    tn = max(_LANE, _round_down(tn // 2, _LANE))
                elif tm_cap > self.sublane:
                    tm_cap = max(self.sublane, tm_cap // 2)
                else:
                    break

        self.tm_cap, self.tn, self.tk = tm_cap, tn, tk
        self.Np = _round_up(OUT, tn)
        self.Kp = _round_up(IN, tk)

        ws = _working_set_bytes(tm_cap, tn, tk, in_bytes, 4, self.residual_net)
        # Raise the scoped VMEM limit (v5e default is only 16 MiB) but stay
        # well under physical capacity (v7x: 64 MiB).
        self.vmem_limit = int(max(ws + (16 << 20),
                                  min(int(0.85 * cap), 100 << 20)))

        # One-time parameter prep: W^T in [IN, OUT] layout, zero-padded to tile
        # multiples, cast to the MXU compute dtype; bias stays f32 (epilogue).
        self.w_t_p = _pad2d(weight.T, self.Kp, self.Np).astype(self.compute_dtype)
        self.b_p = _pad2d(bias.reshape(1, OUT).astype(jnp.float32), 1, self.Np)

    def __call__(self, x):
        B, IN = x.shape
        if IN != self.IN:
            raise ValueError("input feature size mismatch")
        out_dtype = x.dtype

        tm = min(_round_up(B, self.sublane), self.tm_cap)
        Mp = _round_up(B, tm)
        tn, tk = self.tn, self.tk

        x_p = _pad2d(x, Mp, self.Kp).astype(self.compute_dtype)

        w_spec_kwargs = {}
        if self.weight_buffers is not None:
            # Deeper weight buffering for tiny-B, DMA-bound shapes (opt-in).
            w_spec_kwargs["pipeline_mode"] = pl.Buffered(self.weight_buffers)

        in_specs = [
            pl.BlockSpec((tm, tk), lambda i, j, k: (i, k)),                 # x
            pl.BlockSpec((tk, tn), lambda i, j, k: (k, j), **w_spec_kwargs),  # W^T
            pl.BlockSpec((1, tn), lambda i, j, k: (0, j)),                  # bias
        ]
        inputs = [x_p, self.w_t_p, self.b_p]
        if self.residual_net:
            # Kp == Np by construction: reuse x_p as the residual input.
            inputs.append(x_p)
            in_specs.append(pl.BlockSpec((tm, tn), lambda i, j, k: (i, j)))

        kernel = functools.partial(_resnet_kernel, tau=self.tau, m=self.m,
                                   residual_net=self.residual_net)

        in_bytes = self.compute_dtype.itemsize
        cost = pl.CostEstimate(
            flops=2 * B * self.IN * self.OUT,
            transcendentals=0,
            bytes_accessed=(in_bytes * (B * self.IN + self.IN * self.OUT)
                            + 4 * (self.OUT + B * self.OUT)
                            + (in_bytes * B * self.OUT if self.residual_net else 0)),
        )

        out_p = pl.pallas_call(
            kernel,
            out_shape=jax.ShapeDtypeStruct((Mp, self.Np), out_dtype),
            grid_spec=pltpu.PrefetchScalarGridSpec(
                num_scalar_prefetch=0,
                grid=(Mp // tm, self.Np // tn, self.Kp // tk),   # K (reduction) last
                in_specs=in_specs,
                out_specs=pl.BlockSpec((tm, tn), lambda i, j, k: (i, j)),
                scratch_shapes=[pltpu.VMEM((tm, tn), jnp.float32)],
            ),
            compiler_params=pltpu.CompilerParams(
                dimension_semantics=("parallel", "parallel", "arbitrary"),
                vmem_limit_bytes=self.vmem_limit,
            ),
            cost_estimate=cost,
        )(*inputs)

        if (Mp, self.Np) != (B, self.OUT):
            out_p = out_p[:B, :self.OUT]
        return out_p


def resnet_forward(x, weight, bias, *, tau, m, residual_net=False,
                   compute_dtype=jnp.float32):
    """One-shot convenience wrapper (prefer PallasResNet to amortise weight prep)."""
    return PallasResNet(weight, bias, tau=tau, m=m, residual_net=residual_net,
                        compute_dtype=compute_dtype)(x)


def _ref_forward(x, weight, bias, tau, m, residual_net):
    y = jnp.dot(x, weight.T, precision=lax.Precision.HIGHEST) + bias
    crelu = jnp.where(y <= tau, 0.0, jnp.where(y <= tau + m, y - tau, m))
    return crelu + x if residual_net else crelu


if __name__ == "__main__":
    key = jax.random.PRNGKey(0)

    def make_case(key, B, IN, OUT):
        kx, kw, kb = jax.random.split(key, 3)
        bound = 1.0 / (IN ** 0.5)
        x = jax.random.normal(kx, (B, IN), dtype=jnp.float32)
        w = jax.random.uniform(kw, (OUT, IN), jnp.float32, -bound, bound)
        b = jax.random.uniform(kb, (OUT,), jnp.float32, -bound, bound)
        return x, w, b

    k1, k2, k3 = jax.random.split(key, 3)

    # 1) ResNet(32, 32, tau=0.1, m=1.0, residual_net=True), exact f32 path.
    x, w, b = make_case(k1, 8, 32, 32)
    net = PallasResNet(w, b, tau=0.1, m=1.0, residual_net=True,
                       compute_dtype=jnp.float32)
    out = jax.block_until_ready(net(x))
    ref = _ref_forward(x, w, b, 0.1, 1.0, True)
    assert out.shape == ref.shape
    assert jnp.allclose(out, ref, atol=5e-4, rtol=5e-4), "mismatch (case 1)"

    # 2) Non-aligned dims, no residual: exercises padding, output crop and the
    #    >=2-parallel-output-block rule (f32 path).
    x, w, b = make_case(k2, 16, 48, 200)
    net = PallasResNet(w, b, tau=0.05, m=0.7, residual_net=False,
                       compute_dtype=jnp.float32)
    out = jax.block_until_ready(net(x))
    ref = _ref_forward(x, w, b, 0.05, 0.7, False)
    assert jnp.allclose(out, ref, atol=5e-4, rtol=5e-4), "mismatch (case 2)"

    # 3) Multi-tile grid with K accumulation + residual, bf16 MXU inputs with
    #    f32 accumulation (default production path); weight prep amortised
    #    across two forward calls.
    x, w, b = make_case(k3, 64, 256, 256)
    net = PallasResNet(w, b, tau=0.1, m=1.0, residual_net=True,
                       compute_dtype=jnp.bfloat16)
    out = jax.block_until_ready(net(x))
    _ = jax.block_until_ready(net(x))    # reuses prepped/padded weights
    ref = _ref_forward(x, w, b, 0.1, 1.0, True)
    err = float(jnp.max(jnp.abs(out - ref)))
    assert err < 5e-2, f"mismatch (case 3), max abs err {err}"

    print("KERNEL_OK")
</pallas_src>

<mosaic_0001>
module attributes {stable_mosaic.version = 11 : i64} {
  func.func @_resnet_kernel(%arg0: i32, %arg1: i32, %arg2: i32, %arg3: memref<8x128xf32, #tpu.memory_space<vmem>>, %arg4: memref<128x128xf32, #tpu.memory_space<vmem>>, %arg5: memref<1x128xf32, #tpu.memory_space<vmem>>, %arg6: memref<8x128xf32, #tpu.memory_space<vmem>>, %arg7: memref<8x128xf32, #tpu.memory_space<vmem>>, %arg8: memref<8x128xf32, #tpu.memory_space<vmem>>) attributes {dimension_semantics = [#tpu.dimension_semantics<parallel>, #tpu.dimension_semantics<parallel>, #tpu.dimension_semantics<arbitrary>], iteration_bounds = array<i64: 1, 1, 1>, scalar_prefetch = 0 : i64, scratch_operands = 1 : i64, tpu.core_type = #tpu.core_type<tc>, window_params = [{transform_indices = @transform_0, window_bounds = array<i64: 8, 128>}, {transform_indices = @transform_1, window_bounds = array<i64: 128, 128>}, {transform_indices = @transform_2, window_bounds = array<i64: 1, 128>}, {transform_indices = @transform_3, window_bounds = array<i64: 8, 128>}, {transform_indices = @transform_4, window_bounds = array<i64: 8, 128>}]} {
    %c0_i32 = arith.constant 0 : i32
    %0 = arith.cmpi eq, %arg2, %c0_i32 : i32
    %1 = arith.extui %0 : i1 to i32
    %c0_i32_0 = arith.constant 0 : i32
    %2 = arith.cmpi ne, %1, %c0_i32_0 : i32
    scf.if %2 {
      %cst_10 = arith.constant 0.000000e+00 : f32
      %12 = vector.broadcast %cst_10 : f32 to vector<8x128xf32>
      %c0_11 = arith.constant 0 : index
      %c0_12 = arith.constant 0 : index
      %13 = vector.load %arg8[%c0_11, %c0_12] : memref<8x128xf32, #tpu.memory_space<vmem>>, vector<8x128xf32>
      tpu.vector_store %arg8[%c0_11, %c0_12], %12 {strides = array<i32>} : memref<8x128xf32, #tpu.memory_space<vmem>>, vector<8x128xf32>,
    } else {
    }
    %c0 = arith.constant 0 : index
    %c0_1 = arith.constant 0 : index
    %3 = vector.load %arg8[%c0, %c0_1] : memref<8x128xf32, #tpu.memory_space<vmem>>, vector<8x128xf32>
    %c0_2 = arith.constant 0 : index
    %c0_3 = arith.constant 0 : index
    %4 = vector.load %arg3[%c0_2, %c0_3] : memref<8x128xf32, #tpu.memory_space<vmem>>, vector<8x128xf32>
    %c0_4 = arith.constant 0 : index
    %c0_5 = arith.constant 0 : index
    %5 = vector.load %arg4[%c0_4, %c0_5] : memref<128x128xf32, #tpu.memory_space<vmem>>, vector<128x128xf32>
    %cst = arith.constant dense<0.000000e+00> : vector<8x128xf32>
    %6 = tpu.matmul %4, %5, %cst {dimension_numbers = #tpu.dot_dimension_numbers<[1], [0], [0], [1], [0, 0, 1, 1], [], []>} : vector<8x128xf32>, vector<128x128xf32>, vector<8x128xf32> -> vector<8x128xf32>
    %7 = arith.addf %3, %6 : vector<8x128xf32>
    %c0_6 = arith.constant 0 : index
    %c0_7 = arith.constant 0 : index
    %8 = vector.load %arg8[%c0_6, %c0_7] : memref<8x128xf32, #tpu.memory_space<vmem>>, vector<8x128xf32>
    tpu.vector_store %arg8[%c0_6, %c0_7], %7 {strides = array<i32>} : memref<8x128xf32, #tpu.memory_space<vmem>>, vector<8x128xf32>,
    %c0_i32_8 = arith.constant 0 : i32
    %9 = arith.cmpi eq, %arg2, %c0_i32_8 : i32
    %10 = arith.extui %9 : i1 to i32
    %c0_i32_9 = arith.constant 0 : i32
    %11 = arith.cmpi ne, %10, %c0_i32_9 : i32
    scf.if %11 {
      %c0_10 = arith.constant 0 : index
      %c0_11 = arith.constant 0 : index
      %12 = vector.load %arg8[%c0_10, %c0_11] : memref<8x128xf32, #tpu.memory_space<vmem>>, vector<8x128xf32>
      %c0_12 = arith.constant 0 : index
      %c0_13 = arith.constant 0 : index
      %13 = vector.load %arg5[%c0_12, %c0_13] : memref<1x128xf32, #tpu.memory_space<vmem>>, vector<1x128xf32>
      %14 = vector.broadcast %13 : vector<1x128xf32> to vector<8x128xf32>
      %15 = arith.addf %12, %14 : vector<8x128xf32>
      %cst_14 = arith.constant 1.000000e-01 : f32
      %16 = vector.broadcast %cst_14 : f32 to vector<8x128xf32>
      %17 = arith.subf %15, %16 : vector<8x128xf32>
      %cst_15 = arith.constant 0.000000e+00 : f32
      %18 = vector.broadcast %cst_15 : f32 to vector<8x128xf32>
      %19 = arith.maximumf %17, %18 : vector<8x128xf32>
      %cst_16 = arith.constant 1.000000e+00 : f32
      %20 = vector.broadcast %cst_16 : f32 to vector<8x128xf32>
      %21 = arith.minimumf %19, %20 : vector<8x128xf32>
      %c0_17 = arith.constant 0 : index
      %c0_18 = arith.constant 0 : index
      %22 = vector.load %arg6[%c0_17, %c0_18] : memref<8x128xf32, #tpu.memory_space<vmem>>, vector<8x128xf32>
      %23 = arith.addf %21, %22 : vector<8x128xf32>
      %c0_19 = arith.constant 0 : index
      %c0_20 = arith.constant 0 : index
      %24 = vector.load %arg7[%c0_19, %c0_20] : memref<8x128xf32, #tpu.memory_space<vmem>>, vector<8x128xf32>
      tpu.vector_store %arg7[%c0_19, %c0_20], %23 {strides = array<i32>} : memref<8x128xf32, #tpu.memory_space<vmem>>, vector<8x128xf32>,
    } else {
    }
    return
  }
  func.func @transform_0(%arg0: i32, %arg1: i32, %arg2: i32) -> (i32, i32) {
    %c0_i32 = arith.constant 0 : i32
    return %arg0, %arg2 : i32, i32
  }
  func.func @transform_1(%arg0: i32, %arg1: i32, %arg2: i32) -> (i32, i32) {
    %c0_i32 = arith.constant 0 : i32
    return %arg2, %arg1 : i32, i32
  }
  func.func @transform_2(%arg0: i32, %arg1: i32, %arg2: i32) -> (i32, i32) {
    %c0_i32 = arith.constant 0 : i32
    %c0_i32_0 = arith.constant 0 : i32
    return %c0_i32, %arg1 : i32, i32
  }
  func.func @transform_3(%arg0: i32, %arg1: i32, %arg2: i32) -> (i32, i32) {
    %c0_i32 = arith.constant 0 : i32
    return %arg0, %arg1 : i32, i32
  }
  func.func @transform_4(%arg0: i32, %arg1: i32, %arg2: i32) -> (i32, i32) {
    %c0_i32 = arith.constant 0 : i32
    return %arg0, %arg1 : i32, i32
  }
}

</mosaic_0001>

<llo_original>
// kernel: tpu_custom_call.1
$region0: #{tpu_custom_call.1}
  #allocation0 [shape = 'u32[]', space=smem, size = 0x4, offset = 0x4, fixed_abs, tag = 'smem constant byte address 0x4 - core index']
  #allocation1 [shape = 'u32[144,128]{1,0:T(1,128)}', space=vmem, size = 0x12000, scoped, tag = 'internal scratch']
  #allocation2 [shape = 'f32[8,128]{1,0:T(8,128)}', space=vmem, size = 0x1000, scoped, tag = 'scratch operand']
  %s0 = inlined_call_operand.hbm [shape: f32[8,128], index: 0, kind: input, shape index: {}]
  %s1 = inlined_call_operand.hbm [shape: f32[128,128], index: 1, kind: input, shape index: {}]
  %s2 = inlined_call_operand.vmem [shape: f32[1,128], index: 2, kind: input, shape index: {}]
  %s3 = inlined_call_operand.vmem [shape: f32[8,128], index: 3, kind: input, shape index: {}]
  %s4 = inlined_call_operand.hbm [shape: f32[8,128], index: 4, kind: output, shape index: {}]
  %s5 = sld [smem:[#allocation0]]
  $region42: #{tpu_custom_call.1} parent=0
    _
  %s7 = ssub.s32 1, %s5
  %s8 = scalar_select 0, %s7, %s5
  $region1: #{tpu_custom_call.1} parent=0
    #allocation3 [shape = 'u8[4096]{0}', space=vmem, size = 0x1000, scoped, tag = 'input window, operand 0, single buffered']
    #allocation4 [shape = 's32[1]{0}', space=sflag, size = 0x4, scoped, tag = 'scoped memory for tpu_custom_call.1']
    #allocation5 [shape = 's32[1]{0}', space=sflag, size = 0x4, scoped, tag = 'scoped memory for tpu_custom_call.1']
    #allocation6 [shape = 'u8[65536]{0}', space=vmem, size = 0x10000, scoped, tag = 'input window, operand 1, single buffered']
    #allocation7 [shape = 's32[1]{0}', space=sflag, size = 0x4, scoped, tag = 'scoped memory for tpu_custom_call.1']
    #allocation8 [shape = 'u8[4096]{0}', space=vmem, size = 0x1000, scoped, tag = 'output window, operand 0, single buffered']
    %9 = vsyncpa [#allocation4], 0
    %10 = vsyncpa [#allocation7], 0
    %11 = vsyncpa [#allocation5], 0
    // Predicated region
    $region2: #{tpu_custom_call.1} parent=1 // pred_check
      _
    $region3: #{tpu_custom_call.1} parent=1 // pred_check_branch
      %13 = sbr.rel (0) target = $region5
    $region4: #{tpu_custom_call.1} parent=1 // pred_region
      %s15 = ssub.s32 128, 128
      %16 = vsyncadd [#allocation4], %s15
      %s18 = sshll.u32 [#allocation3], 4
      %s19 = int_to_ptr.vmem [resolvable:$true] %s18
      %21 = dma.hbm_to_vmem [thread:$0]  %s0, 128, %s19, [#allocation4]
    $region5: #{tpu_custom_call.1} parent=1 // pred_fallthru
      _
    // Predicated region
    $region6: #{tpu_custom_call.1} parent=1 // pred_check
      _
    $region7: #{tpu_custom_call.1} parent=1 // pred_check_branch
      %23 = sbr.rel (0) target = $region9
    $region8: #{tpu_custom_call.1} parent=1 // pred_region
      %s25 = ssub.s32 2048, 2048
      %26 = vsyncadd [#allocation7], %s25
      %s27 = sshll.u32 [#allocation6], 4
      %s28 = int_to_ptr.vmem [resolvable:$true] %s27
      %33 = dma.hbm_to_vmem [thread:$0]  %s1, 2048, %s28, [#allocation7], 128, 128, 8
    $region9: #{tpu_custom_call.1} parent=1 // pred_fallthru
      _
    // Predicated region
    $region10: #{tpu_custom_call.1} parent=1 // pred_check
      _
    $region11: #{tpu_custom_call.1} parent=1 // pred_check_branch
      %35 = sbr.rel (0) target = $region13
    $region12: #{tpu_custom_call.1} parent=1 // pred_region
      _
    $region13: #{tpu_custom_call.1} parent=1 // pred_fallthru
      _
    // Predicated region
    $region14: #{tpu_custom_call.1} parent=1 // pred_check
      _
    $region15: #{tpu_custom_call.1} parent=1 // pred_check_branch
      %37 = sbr.rel (0) target = $region17
    $region16: #{tpu_custom_call.1} parent=1 // pred_region
      _
    $region17: #{tpu_custom_call.1} parent=1 // pred_fallthru
      _
    // Predicated region
    $region18: #{tpu_custom_call.1} parent=1 // pred_check
      _
    $region19: #{tpu_custom_call.1} parent=1 // pred_check_branch
      %39 = sbr.rel (0) target = $region21
    $region20: #{tpu_custom_call.1} parent=1 // pred_region
      %40 = dma.done [#allocation4], 128
    $region21: #{tpu_custom_call.1} parent=1 // pred_fallthru
      _
    // Predicated region
    $region22: #{tpu_custom_call.1} parent=1 // pred_check
      _
    $region23: #{tpu_custom_call.1} parent=1 // pred_check_branch
      %42 = sbr.rel (0) target = $region25
    $region24: #{tpu_custom_call.1} parent=1 // pred_region
      %43 = dma.done [#allocation7], 2048
    $region25: #{tpu_custom_call.1} parent=1 // pred_fallthru
      _
    %p44 = scmp.eq.s32.totalorder 0, 0
    // Predicated region
    $region26: #{tpu_custom_call.1} parent=1 // pred_check
      %p45 = pneg %p44
    $region27: #{tpu_custom_call.1} parent=1 // pred_check_branch
      %47 = sbr.rel (%p45) target = $region29
    $region28: #{tpu_custom_call.1} parent=1 // pred_region
      %48 = vst [vmem:[#allocation2] sm:$0xff] 0.0
    $region29: #{tpu_custom_call.1} parent=1 // pred_fallthru
      _
    %v49 = vld [vmem:[#allocation2] sm:$0xff]
    %v50 = vld [vmem:[#allocation3] sm:$0xff]
    %v51 = vld [vmem:[#allocation6] sm:$0xff]
    %v52 = vld [vmem:[#allocation6 + $0x8] sm:$0xff]
    %v53 = vld [vmem:[#allocation6 + $0x10] sm:$0xff]
    %v54 = vld [vmem:[#allocation6 + $0x18] sm:$0xff]
    %v55 = vld [vmem:[#allocation6 + $0x20] sm:$0xff]
    %v56 = vld [vmem:[#allocation6 + $0x28] sm:$0xff]
    %v57 = vld [vmem:[#allocation6 + $0x30] sm:$0xff]
    %v58 = vld [vmem:[#allocation6 + $0x38] sm:$0xff]
    %v59 = vld [vmem:[#allocation6 + $0x40] sm:$0xff]
    %v60 = vld [vmem:[#allocation6 + $0x48] sm:$0xff]
    %v61 = vld [vmem:[#allocation6 + $0x50] sm:$0xff]
    %v62 = vld [vmem:[#allocation6 + $0x58] sm:$0xff]
    %v63 = vld [vmem:[#allocation6 + $0x60] sm:$0xff]
    %v64 = vld [vmem:[#allocation6 + $0x68] sm:$0xff]
    %v65 = vld [vmem:[#allocation6 + $0x70] sm:$0xff]
    %v66 = vld [vmem:[#allocation6 + $0x78] sm:$0xff]
    %67 = vmatprep.subr.mxu0 0.0
    %68 = vmatpush1.msra.mxu0 %v51
    %69 = vmatprep.subr.mxu0 0.0
    %70 = vmatpush1.msra.mxu0 %v52
    %71 = vmatprep.subr.mxu0 0.0
    %72 = vmatpush1.msra.mxu0 %v53
    %73 = vmatprep.subr.mxu0 0.0
    %74 = vmatpush1.msra.mxu0 %v54
    %75 = vmatprep.subr.mxu0 0.0
    %76 = vmatpush1.msra.mxu0 %v55
    %77 = vmatprep.subr.mxu0 0.0
    %78 = vmatpush1.msra.mxu0 %v56
    %79 = vmatprep.subr.mxu0 0.0
    %80 = vmatpush1.msra.mxu0 %v57
    %81 = vmatprep.subr.mxu0 0.0
    %82 = vmatpush1.msra.mxu0 %v58
    %83 = vmatprep.subr.mxu0 0.0
    %84 = vmatpush1.msra.mxu0 %v59
    %85 = vmatprep.subr.mxu0 0.0
    %86 = vmatpush1.msra.mxu0 %v60
    %87 = vmatprep.subr.mxu0 0.0
    %88 = vmatpush1.msra.mxu0 %v61
    %89 = vmatprep.subr.mxu0 0.0
    %90 = vmatpush1.msra.mxu0 %v62
    %91 = vmatprep.subr.mxu0 0.0
    %92 = vmatpush1.msra.mxu0 %v63
    %93 = vmatprep.subr.mxu0 0.0
    %94 = vmatpush1.msra.mxu0 %v64
    %95 = vmatprep.subr.mxu0 0.0
    %96 = vmatpush1.msra.mxu0 %v65
    %97 = vmatprep.subr.mxu0 0.0
    %98 = vmatpush1.msra.mxu0 %v66
    %99 = vmatprep.subr.mxu0 0.0
    %100 = vmatpush1.msra.mxu0 0.0
    %101 = vmatprep.subr.mxu0 0.0
    %102 = vmatpush1.msra.mxu0 0.0
    %103 = vmatprep.subr.mxu0 0.0
    %104 = vmatpush1.msra.mxu0 0.0
    %105 = vmatprep.subr.mxu0 0.0
    %106 = vmatpush1.msra.mxu0 0.0
    %107 = vmatprep.subr.mxu0 0.0
    %108 = vmatpush1.msra.mxu0 0.0
    %109 = vmatprep.subr.mxu0 0.0
    %110 = vmatpush1.msra.mxu0 0.0
    %111 = vmatprep.subr.mxu0 0.0
    %112 = vmatpush1.msra.mxu0 0.0
    %113 = vmatprep.subr.mxu0 0.0
    %114 = vmatpush1.msra.mxu0 0.0
    %115 = vmatprep.subr.mxu0 0.0
    %116 = vmatpush1.msra.mxu0 0.0
    %117 = vmatprep.subr.mxu0 0.0
    %118 = vmatpush1.msra.mxu0 0.0
    %119 = vmatprep.subr.mxu0 0.0
    %120 = vmatpush1.msra.mxu0 0.0
    %121 = vmatprep.subr.mxu0 0.0
    %122 = vmatpush1.msra.mxu0 0.0
    %123 = vmatprep.subr.mxu0 0.0
    %124 = vmatpush1.msra.mxu0 0.0
    %125 = vmatprep.subr.mxu0 0.0
    %126 = vmatpush1.msra.mxu0 0.0
    %127 = vmatprep.subr.mxu0 0.0
    %128 = vmatpush1.msra.mxu0 0.0
    %129 = vmatprep.subr.mxu0 0.0
    %130 = vmatpush1.msra.mxu0 0.0
    %131 = vmatprep.mubr.f32.mxu0 0.0
    %132 = vmatmul.mubr.f32.gmra.mrb[0].mxu0 %v50
    %v133 = vpop.f32.mrb[0].mxu0
    %v134 = vadd.f32 0.0, %v133
    %v135 = vpop.f32.mrb[0].mxu0
    %136 = vdwg.mxu0
    %v137 = vadd.f32 %v49, %v134
    %138 = vst [vmem:[#allocation2] sm:$0xff] %v137
    // Predicated region
    $region30: #{tpu_custom_call.1} parent=1 // pred_check
      %p139 = pneg %p44
    $region31: #{tpu_custom_call.1} parent=1 // pred_check_branch
      %141 = sbr.rel (%p139) target = $region33
    $region32: #{tpu_custom_call.1} parent=1 // pred_region
      %v142 = vld [vmem:[#allocation2] sm:$0xff]
      %v143 = vld [vmem:[%s2] sm:$0x1]
      %v145 = vlaneseq
      %v146 = vshrl.u32 %v145, 7
      %v147 = vsub.s32 0, %v146
      %v148 = vrot.slane %v143, %v147
      %v150 = vadd.f32 %v142, %v148
      %v151 = vsub.f32 %v150, 0.1
      %v152 = vmax.f32 %v151, 0.0
      %v153 = vmin.f32 %v152, 1.0
      %v154 = vld [vmem:[%s3] sm:$0xff]
      %v155 = vadd.f32 %v153, %v154
      %156 = vst [vmem:[#allocation8] sm:$0xff] %v155
    $region33: #{tpu_custom_call.1} parent=1 // pred_fallthru
      _
    // Predicated region
    $region34: #{tpu_custom_call.1} parent=1 // pred_check
      _
    $region35: #{tpu_custom_call.1} parent=1 // pred_check_branch
      %158 = sbr.rel (0) target = $region37
    $region36: #{tpu_custom_call.1} parent=1 // pred_region
      %s160 = ssub.s32 128, 128
      %161 = vsyncadd [#allocation5], %s160
      %s163 = sshll.u32 [#allocation8], 4
      %s164 = int_to_ptr.vmem [resolvable:$true] %s163
      %166 = dma.vmem_to_hbm [thread:$0]  %s164, 128, %s4, [#allocation5]
    $region37: #{tpu_custom_call.1} parent=1 // pred_fallthru
      _
    // Predicated region
    $region38: #{tpu_custom_call.1} parent=1 // pred_check
      _
    $region39: #{tpu_custom_call.1} parent=1 // pred_check_branch
      %168 = sbr.rel (0) target = $region41
    $region40: #{tpu_custom_call.1} parent=1 // pred_region
      %169 = dma.done [#allocation5], 128
    $region41: #{tpu_custom_call.1} parent=1 // pred_fallthru
      _
    %170 = vsyncpa [#allocation4], 1
    %171 = vsyncpa [#allocation7], 1
    %172 = vsyncpa [#allocation5], 1

</llo_original>
